<compile_context>
chip_gen: v6e
topology: v6e:2x2x1
jax: 0.10.0
libtpu: 0.0.40
codegen_flags: <defaults>
</compile_context>

<pallas_src>
import functools
import math

import jax
import jax.numpy as jnp
from jax import lax
from jax.experimental import pallas as pl
from jax.experimental.pallas import tpu as pltpu


def _infonce_kernel(zjs_ref, zis_ref, out_ref, keys_ref, *,
                    batch_size, temperature, use_cosine, block_rows,
                    pos_by_slice):
    """One grid step: `block_rows` query rows vs. all N = 2*batch keys.

    zjs_ref, zis_ref : (B, D) f32 in VMEM (resident across grid steps)
    out_ref          : (block_rows, 1) f32 — per-row (logsumexp - positive)
    keys_ref         : (N, D) f32 VMEM scratch — normalized / scaled reps
    """
    n = 2 * batch_size
    inv_sqrt_t = 1.0 / math.sqrt(temperature)

    zjs = zjs_ref[...].astype(jnp.float32)
    zis = zis_ref[...].astype(jnp.float32)

    if use_cosine:
        # Row-normalize once (EUP rsqrt), folding in 1/sqrt(temperature), so
        # the MXU matmul directly produces cos_sim / temperature. The eps
        # clamp is per-row (~ max(||x||, 1e-8)) vs torch's
        # max(||x||*||y||, 1e-8): identical for non-degenerate inputs.
        sj = jnp.maximum(jnp.sum(zjs * zjs, axis=-1, keepdims=True), 1e-16)
        si = jnp.maximum(jnp.sum(zis * zis, axis=-1, keepdims=True), 1e-16)
        zjs = zjs * (lax.rsqrt(sj) * inv_sqrt_t)
        zis = zis * (lax.rsqrt(si) * inv_sqrt_t)
    else:
        zjs = zjs * inv_sqrt_t
        zis = zis * inv_sqrt_t

    # representations = cat([zjs, zis], dim=0), built directly in VMEM.
    # (Recomputed each grid step: O(N*D) VPU work, negligible vs. the
    #  O(TM*N) exp path, and keeps the row-tile grid axis safely "parallel".)
    keys_ref[pl.ds(0, batch_size), :] = zjs
    keys_ref[pl.ds(batch_size, batch_size), :] = zis

    t = pl.program_id(0)
    row_start = pl.multiple_of(t * block_rows, block_rows)

    q = keys_ref[pl.ds(row_start, block_rows), :]            # (TM, D)
    keys = keys_ref[...]                                     # (N, D)

    # s[i, j] = <q_i, k_j> — contract last dims, no transpose materialized.
    s = lax.dot_general(q, keys, (((1,), (1,)), ((), ())),
                        preferred_element_type=jnp.float32)  # (TM, N)

    row = lax.broadcasted_iota(jnp.int32, (block_rows, n), 0) + row_start
    col = lax.broadcasted_iota(jnp.int32, (block_rows, n), 1)

    if pos_by_slice:
        # Partner of global row g is (g + batch_size) mod N; with
        # block_rows | batch_size those partners form one contiguous tile.
        p_start = pl.multiple_of((row_start + batch_size) % n, block_rows)
        partner = keys_ref[pl.ds(p_start, block_rows), :]
        pos = jnp.sum(q * partner, axis=-1, keepdims=True)   # (TM, 1)
    else:
        pos_mask = col == ((row + batch_size) % n)
        pos = jnp.sum(jnp.where(pos_mask, s, 0.0), axis=-1, keepdims=True)

    # Cross-entropy with label 0 over [positive, negatives] equals
    #   logsumexp over all j != i  -  positive logit
    # (the excluded entries are exactly the diagonal).
    s = jnp.where(row == col, -jnp.inf, s)
    m = jnp.max(s, axis=-1, keepdims=True)
    lse = m + jnp.log(jnp.sum(jnp.exp(s - m), axis=-1, keepdims=True))

    out_ref[...] = lse - pos


def _pick_row_tile(batch_size):
    """Largest multiple-of-8 divisor of batch_size, capped at 256."""
    for tm in (256, 128, 64, 32, 16, 8):
        if tm <= batch_size and batch_size % tm == 0:
            return tm
    return None


def infonce_loss(zis, zjs, *, temperature, use_cosine_similarity):
    """Matches InfoNCELoss(device, batch_size, temperature, use_cosine).forward."""
    assert zis.shape == zjs.shape and zis.ndim == 2
    batch_size, hidden = zis.shape
    n = 2 * batch_size

    block_rows = _pick_row_tile(batch_size)
    if block_rows is None:
        # Odd/small batch: one tile over all rows; positives via mask.
        block_rows, pos_by_slice = n, False
    else:
        pos_by_slice = True
    num_tiles = n // block_rows

    kernel = functools.partial(
        _infonce_kernel,
        batch_size=batch_size,
        temperature=float(temperature),
        use_cosine=bool(use_cosine_similarity),
        block_rows=block_rows,
        pos_by_slice=pos_by_slice,
    )

    partial_losses = pl.pallas_call(
        kernel,
        out_shape=jax.ShapeDtypeStruct((n, 1), jnp.float32),
        grid=(num_tiles,),
        in_specs=[
            pl.BlockSpec((batch_size, hidden), lambda i: (0, 0)),
            pl.BlockSpec((batch_size, hidden), lambda i: (0, 0)),
        ],
        out_specs=pl.BlockSpec((block_rows, 1), lambda i: (i, 0)),
        scratch_shapes=[pltpu.VMEM((n, hidden), jnp.float32)],
        compiler_params=pltpu.CompilerParams(
            dimension_semantics=("parallel",)),
    )(zjs, zis)

    # reduction='sum' then divide by 2*batch_size.
    return jnp.sum(partial_losses) / n


def _infonce_reference(zis, zjs, *, temperature, use_cosine_similarity):
    """Pure-JAX reference mirroring the PyTorch module."""
    b = zis.shape[0]
    rep = jnp.concatenate([zjs, zis], axis=0).astype(jnp.float32)
    n = 2 * b
    s = rep @ rep.T
    if use_cosine_similarity:
        norms = jnp.linalg.norm(rep, axis=-1, keepdims=True)
        s = s / jnp.maximum(norms * norms.T, 1e-8)
    s = s / temperature
    idx = jnp.arange(n)
    pos = s[idx, (idx + b) % n]
    s_masked = jnp.where(jnp.eye(n, dtype=bool), -jnp.inf, s)
    lse = jax.nn.logsumexp(s_masked, axis=-1)
    return jnp.sum(lse - pos) / n


if __name__ == "__main__":
    batch_size = 8
    hidden = 32
    temperature = 0.5

    key = jax.random.PRNGKey(0)
    k1, k2 = jax.random.split(key)
    zis = jax.random.normal(k1, (batch_size, hidden), dtype=jnp.float32)
    zjs = jax.random.normal(k2, (batch_size, hidden), dtype=jnp.float32)

    for use_cosine in (True, False):
        loss = infonce_loss(
            zis, zjs, temperature=temperature, use_cosine_similarity=use_cosine
        )
        loss = jax.block_until_ready(loss)
        ref = _infonce_reference(
            zis, zjs, temperature=temperature, use_cosine_similarity=use_cosine
        )
        assert jnp.allclose(loss, ref, rtol=1e-5, atol=1e-4), (use_cosine, loss, ref)

    print("KERNEL_OK")
</pallas_src>

<mosaic_0001>
module attributes {stable_mosaic.version = 11 : i64} {
  func.func @_infonce_kernel(%arg0: i32, %arg1: memref<8x32xf32, #tpu.memory_space<vmem>>, %arg2: memref<8x32xf32, #tpu.memory_space<vmem>>, %arg3: memref<8x1xf32, #tpu.memory_space<vmem>>, %arg4: memref<16x32xf32, #tpu.memory_space<vmem>>) attributes {dimension_semantics = [#tpu.dimension_semantics<parallel>], iteration_bounds = array<i64: 2>, scalar_prefetch = 0 : i64, scratch_operands = 1 : i64, tpu.core_type = #tpu.core_type<tc>, window_params = [{pipeline_mode = #tpu.pipeline_mode<synchronous>, transform_indices = @transform_0, window_bounds = array<i64: 8, 32>}, {pipeline_mode = #tpu.pipeline_mode<synchronous>, transform_indices = @transform_1, window_bounds = array<i64: 8, 32>}, {transform_indices = @transform_2, window_bounds = array<i64: 8, 1>}]} {
    %c0 = arith.constant 0 : index
    %c0_0 = arith.constant 0 : index
    %0 = vector.load %arg1[%c0, %c0_0] : memref<8x32xf32, #tpu.memory_space<vmem>>, vector<8x32xf32>
    %c0_1 = arith.constant 0 : index
    %c0_2 = arith.constant 0 : index
    %1 = vector.load %arg2[%c0_1, %c0_2] : memref<8x32xf32, #tpu.memory_space<vmem>>, vector<8x32xf32>
    %2 = arith.mulf %0, %0 : vector<8x32xf32>
    %cst = arith.constant dense<0.000000e+00> : vector<8xf32>
    %3 = vector.multi_reduction <add>, %2, %cst [1] : vector<8x32xf32> to vector<8xf32>
    %4 = vector.shape_cast %3 : vector<8xf32> to vector<8x1xf32>
    %cst_3 = arith.constant 1.000000e-16 : f32
    %5 = vector.broadcast %cst_3 : f32 to vector<8x1xf32>
    %6 = arith.maximumf %4, %5 : vector<8x1xf32>
    %7 = arith.mulf %1, %1 : vector<8x32xf32>
    %cst_4 = arith.constant dense<0.000000e+00> : vector<8xf32>
    %8 = vector.multi_reduction <add>, %7, %cst_4 [1] : vector<8x32xf32> to vector<8xf32>
    %9 = vector.shape_cast %8 : vector<8xf32> to vector<8x1xf32>
    %cst_5 = arith.constant 1.000000e-16 : f32
    %10 = vector.broadcast %cst_5 : f32 to vector<8x1xf32>
    %11 = arith.maximumf %9, %10 : vector<8x1xf32>
    %12 = math.rsqrt %6 : vector<8x1xf32>
    %cst_6 = arith.constant 1.41421354 : f32
    %13 = vector.broadcast %cst_6 : f32 to vector<8x1xf32>
    %14 = arith.mulf %12, %13 : vector<8x1xf32>
    %15 = vector.broadcast %14 : vector<8x1xf32> to vector<8x32xf32>
    %16 = arith.mulf %0, %15 : vector<8x32xf32>
    %17 = math.rsqrt %11 : vector<8x1xf32>
    %cst_7 = arith.constant 1.41421354 : f32
    %18 = vector.broadcast %cst_7 : f32 to vector<8x1xf32>
    %19 = arith.mulf %17, %18 : vector<8x1xf32>
    %20 = vector.broadcast %19 : vector<8x1xf32> to vector<8x32xf32>
    %21 = arith.mulf %1, %20 : vector<8x32xf32>
    %c0_8 = arith.constant 0 : index
    %c0_9 = arith.constant 0 : index
    %22 = vector.load %arg4[%c0_8, %c0_9] : memref<16x32xf32, #tpu.memory_space<vmem>>, vector<8x32xf32>
    tpu.vector_store %arg4[%c0_8, %c0_9], %16 {strides = array<i32>} : memref<16x32xf32, #tpu.memory_space<vmem>>, vector<8x32xf32>,
    %c8 = arith.constant 8 : index
    %c0_10 = arith.constant 0 : index
    %23 = vector.load %arg4[%c8, %c0_10] : memref<16x32xf32, #tpu.memory_space<vmem>>, vector<8x32xf32>
    tpu.vector_store %arg4[%c8, %c0_10], %21 {strides = array<i32>} : memref<16x32xf32, #tpu.memory_space<vmem>>, vector<8x32xf32>,
    %c8_i32 = arith.constant 8 : i32
    %24 = arith.muli %arg0, %c8_i32 : i32
    %25 = tpu.assume_multiple %24, 8 : i32
    %26 = arith.index_cast %25 : i32 to index
    %c0_11 = arith.constant 0 : index
    %27 = vector.load %arg4[%26, %c0_11] : memref<16x32xf32, #tpu.memory_space<vmem>>, vector<8x32xf32>
    %c0_12 = arith.constant 0 : index
    %c0_13 = arith.constant 0 : index
    %28 = vector.load %arg4[%c0_12, %c0_13] : memref<16x32xf32, #tpu.memory_space<vmem>>, vector<16x32xf32>
    %cst_14 = arith.constant dense<0.000000e+00> : vector<8x16xf32>
    %29 = tpu.matmul %27, %28, %cst_14 {dimension_numbers = #tpu.dot_dimension_numbers<[1], [1], [0], [0], [0, 0, 1, 0], [], []>} : vector<8x32xf32>, vector<16x32xf32>, vector<8x16xf32> -> vector<8x16xf32>
    %30 = tpu.iota {dimensions = array<i32: 0>} : vector<8x16xi32>
    %31 = vector.broadcast %25 : i32 to vector<8x16xi32>
    %32 = arith.addi %30, %31 : vector<8x16xi32>
    %33 = tpu.iota {dimensions = array<i32: 1>} : vector<8x16xi32>
    %c8_i32_15 = arith.constant 8 : i32
    %34 = arith.addi %25, %c8_i32_15 : i32
    %c16_i32 = arith.constant 16 : i32
    %c0_i32 = arith.constant 0 : i32
    %35 = arith.cmpi eq, %c16_i32, %c0_i32 : i32
    %c1_i32 = arith.constant 1 : i32
    %36 = arith.select %35, %c1_i32, %c16_i32 : i32
    %37 = arith.remsi %34, %36 : i32
    %c0_i32_16 = arith.constant 0 : i32
    %38 = arith.cmpi ne, %37, %c0_i32_16 : i32
    %c0_i32_17 = arith.constant 0 : i32
    %39 = arith.cmpi slt, %37, %c0_i32_17 : i32
    %c0_i32_18 = arith.constant 0 : i32
    %40 = arith.cmpi slt, %36, %c0_i32_18 : i32
    %41 = arith.xori %39, %40 : i1
    %42 = arith.andi %41, %38 : i1
    %43 = arith.addi %37, %36 : i32
    %44 = arith.select %42, %43, %37 : i32
    %45 = tpu.assume_multiple %44, 8 : i32
    %46 = arith.index_cast %45 : i32 to index
    %c0_19 = arith.constant 0 : index
    %47 = vector.load %arg4[%46, %c0_19] : memref<16x32xf32, #tpu.memory_space<vmem>>, vector<8x32xf32>
    %48 = arith.mulf %27, %47 : vector<8x32xf32>
    %cst_20 = arith.constant dense<0.000000e+00> : vector<8xf32>
    %49 = vector.multi_reduction <add>, %48, %cst_20 [1] : vector<8x32xf32> to vector<8xf32>
    %50 = vector.shape_cast %49 : vector<8xf32> to vector<8x1xf32>
    %51 = arith.cmpi eq, %32, %33 : vector<8x16xi32>
    %cst_21 = arith.constant 0xFF800000 : f32
    %52 = vector.broadcast %cst_21 : f32 to vector<8x16xf32>
    %53 = arith.select %51, %52, %29 : vector<8x16xi1>, vector<8x16xf32>
    %cst_22 = arith.constant dense<0xFF800000> : vector<8xf32>
    %54 = vector.multi_reduction <maximumf>, %53, %cst_22 [1] : vector<8x16xf32> to vector<8xf32>
    %55 = vector.shape_cast %54 : vector<8xf32> to vector<8x1xf32>
    %56 = vector.broadcast %55 : vector<8x1xf32> to vector<8x16xf32>
    %57 = arith.subf %53, %56 : vector<8x16xf32>
    %58 = math.exp %57 : vector<8x16xf32>
    %cst_23 = arith.constant dense<0.000000e+00> : vector<8xf32>
    %59 = vector.multi_reduction <add>, %58, %cst_23 [1] : vector<8x16xf32> to vector<8xf32>
    %60 = vector.shape_cast %59 : vector<8xf32> to vector<8x1xf32>
    %61 = math.log %60 : vector<8x1xf32>
    %62 = arith.addf %55, %61 : vector<8x1xf32>
    %63 = arith.subf %62, %50 : vector<8x1xf32>
    %c0_24 = arith.constant 0 : index
    %c0_25 = arith.constant 0 : index
    %64 = vector.load %arg3[%c0_24, %c0_25] : memref<8x1xf32, #tpu.memory_space<vmem>>, vector<8x1xf32>
    tpu.vector_store %arg3[%c0_24, %c0_25], %63 {strides = array<i32>} : memref<8x1xf32, #tpu.memory_space<vmem>>, vector<8x1xf32>,
    return
  }
  func.func @transform_0(%arg0: i32) -> (i32, i32) {
    %c0_i32 = arith.constant 0 : i32
    %c0_i32_0 = arith.constant 0 : i32
    %c0_i32_1 = arith.constant 0 : i32
    return %c0_i32, %c0_i32_0 : i32, i32
  }
  func.func @transform_1(%arg0: i32) -> (i32, i32) {
    %c0_i32 = arith.constant 0 : i32
    %c0_i32_0 = arith.constant 0 : i32
    %c0_i32_1 = arith.constant 0 : i32
    return %c0_i32, %c0_i32_0 : i32, i32
  }
  func.func @transform_2(%arg0: i32) -> (i32, i32) {
    %c0_i32 = arith.constant 0 : i32
    %c0_i32_0 = arith.constant 0 : i32
    return %arg0, %c0_i32 : i32, i32
  }
}

</mosaic_0001>

<llo_original>
// kernel: tpu_custom_call.1
$region0: #{tpu_custom_call.1}
  #allocation0 [shape = 'u32[]', space=smem, size = 0x4, offset = 0x4, fixed_abs, tag = 'smem constant byte address 0x4 - core index']
  #allocation1 [shape = 'u32[144,128]{1,0:T(1,128)}', space=vmem, size = 0x12000, scoped, tag = 'internal scratch']
  #allocation2 [shape = 'f32[16,32]{1,0:T(8,128)}', space=vmem, size = 0x2000, scoped, tag = 'scratch operand']
  %s0 = inlined_call_operand.hbm [shape: f32[8,32], index: 0, kind: input, shape index: {}]
  %s1 = inlined_call_operand.hbm [shape: f32[8,32], index: 1, kind: input, shape index: {}]
  %s2 = inlined_call_operand.vmem [shape: f32[16,1], index: 2, kind: output, shape index: {}]
  %s3 = sld [smem:[#allocation0]]
  $region49: #{tpu_custom_call.1} parent=0
    _
  %s5 = ssub.s32 1, %s3
  %s6 = scalar_select 0, %s5, %s3
  $region1: #{tpu_custom_call.1} parent=0
    #allocation3 [shape = 'u8[4096]{0}', space=vmem, size = 0x1000, scoped, tag = 'input window, operand 0, single buffered']
    #allocation4 [shape = 's32[2]{0}', space=sflag, size = 0x8, scoped, tag = 'scoped memory for tpu_custom_call.1']
    #allocation5 [shape = 'u8[4096]{0}', space=vmem, size = 0x1000, scoped, tag = 'input window, operand 1, single buffered']
    #allocation6 [shape = 's32[1]{0}', space=sflag, size = 0x4, scoped, tag = 'scoped memory for tpu_custom_call.1']
    %7 = vsyncpa [#allocation4], 0
    %8 = vsyncpa [#allocation6], 0
    loop: start=0, step=1, limit=4
    $region2: #{tpu_custom_call.1} parent=1 // loop_pre_header
      _
    $region3: #{tpu_custom_call.1} parent=1 // loop_header
      %s10 = sphi 0, %s14
      %p11 = scmp.ge.s32.totalorder %s10, 4
      %s18 = sphi 0, %s18
      %s20 = sphi 0, %s18
      %s21 = sphi 0, %s20
      %s35 = sphi 0, %s21
      %s39 = sphi 0, %s39
      %s41 = sphi 0, %s39
      %s42 = sphi 0, %s41
      %s56 = sphi 0, %s42
      %s62 = sphi 0, %s64
      %s65 = sphi 0, %s62
      %s66 = sphi 0, %s65
      %s82 = sphi 0, %s66
    $region4: #{tpu_custom_call.1} parent=1 // loop_header_branch
      %13 = sbr.rel (%p11) target = $region8
    $region5: #{tpu_custom_call.1} parent=1 // loop_body
      %s15 = ssub.s32 %s10, 1
      %s16 = ssub.s32 %s10, 2
      %s17 = sadd.s32 %s10, 1
      %s19 = sadd.s32 %s18, 1
      %p22 = scmp.eq.s32.totalorder %s10, 1
      %p23 = scmp.ne.s32.totalorder %s18, %s20
      %p24 = scmp.eq.s32.totalorder %s10, 0
      %p25 = por %p23, %p24
      %p26 = scmp.ne.s32.totalorder %s18, %s20
      %p27 = scmp.eq.s32.totalorder %s15, 1
      %p28 = por %p26, %p27
      %p29 = scmp.ne.s32.totalorder %s20, %s21
      %p30 = scmp.eq.s32.totalorder %s15, 0
      %p31 = por %p29, %p30
      %p32 = scmp.ne.s32.totalorder %s20, %s21
      %p33 = scmp.eq.s32.totalorder %s16, 1
      %p34 = por %p32, %p33
      %p36 = scmp.ne.s32.totalorder %s21, %s35
      %p37 = scmp.eq.s32.totalorder %s16, 0
      %p38 = por %p36, %p37
      %s40 = sadd.s32 %s39, 1
      %p43 = scmp.eq.s32.totalorder %s10, 1
      %p44 = scmp.ne.s32.totalorder %s39, %s41
      %p45 = scmp.eq.s32.totalorder %s10, 0
      %p46 = por %p44, %p45
      %p47 = scmp.ne.s32.totalorder %s39, %s41
      %p48 = scmp.eq.s32.totalorder %s15, 1
      %p49 = por %p47, %p48
      %p50 = scmp.ne.s32.totalorder %s41, %s42
      %p51 = scmp.eq.s32.totalorder %s15, 0
      %p52 = por %p50, %p51
      %p53 = scmp.ne.s32.totalorder %s41, %s42
      %p54 = scmp.eq.s32.totalorder %s16, 1
      %p55 = por %p53, %p54
      %p57 = scmp.ne.s32.totalorder %s42, %s56
      %p58 = scmp.eq.s32.totalorder %s16, 0
      %p59 = por %p57, %p58
      %s60 = ssub.s32 %s10, %s17
      %p61 = scmp.eq.s32.totalorder %s60, 0
      %s63 = sadd.s32 %s62, 1
      %s64 = scalar_select %p61, %s62, %s63
      %p67 = pneg %p61
      %p68 = scmp.eq.s32.totalorder %s10, 1
      %p69 = por %p67, %p68
      %p70 = scmp.ne.s32.totalorder %s62, %s65
      %p71 = scmp.eq.s32.totalorder %s10, 0
      %p72 = por %p70, %p71
      %p73 = scmp.ne.s32.totalorder %s62, %s65
      %p74 = scmp.eq.s32.totalorder %s15, 1
      %p75 = por %p73, %p74
      %p76 = scmp.ne.s32.totalorder %s65, %s66
      %p77 = scmp.eq.s32.totalorder %s15, 0
      %p78 = por %p76, %p77
      %p79 = scmp.ne.s32.totalorder %s65, %s66
      %p80 = scmp.eq.s32.totalorder %s16, 1
      %p81 = por %p79, %p80
      %p83 = scmp.ne.s32.totalorder %s66, %s82
      %p84 = scmp.eq.s32.totalorder %s16, 0
      %p85 = por %p83, %p84
      %p86 = scmp.le.s32.totalorder 1, %s10
      %p87 = scmp.lt.s32.totalorder %s10, 3
      %p88 = pnand %p86, %p87
      %p89 = pneg %p88
      // Predicated region
      $region9: #{tpu_custom_call.1} parent=5 // pred_check
        _
      $region10: #{tpu_custom_call.1} parent=5 // pred_check_branch
        %91 = sbr.rel (%p88) target = $region12
      $region11: #{tpu_custom_call.1} parent=5 // pred_region
        %s92 = ssub.s32 %s10, 1
        // Predicated region
        $region13: #{tpu_custom_call.1} parent=11 // pred_check
          %p93 = pneg %p31
        $region14: #{tpu_custom_call.1} parent=11 // pred_check_branch
          %95 = sbr.rel (%p93) target = $region16
        $region15: #{tpu_custom_call.1} parent=11 // pred_region
          %s97 = ssub.s32 128, 128
          %98 = vsyncadd [#allocation4], %s97
          %s100 = sshll.u32 [#allocation3], 4
          %s101 = int_to_ptr.vmem [resolvable:$true] %s100
          %103 = dma.hbm_to_vmem [thread:$0]  %s0, 128, %s101, [#allocation4]
        $region16: #{tpu_custom_call.1} parent=11 // pred_fallthru
          _
        // Predicated region
        $region17: #{tpu_custom_call.1} parent=11 // pred_check
          %p104 = pneg %p52
        $region18: #{tpu_custom_call.1} parent=11 // pred_check_branch
          %106 = sbr.rel (%p104) target = $region20
        $region19: #{tpu_custom_call.1} parent=11 // pred_region
          %s108 = ssub.s32 128, 128
          %109 = vsyncadd [#allocation6], %s108
          %s111 = sshll.u32 [#allocation5], 4
          %s112 = int_to_ptr.vmem [resolvable:$true] %s111
          %114 = dma.hbm_to_vmem [thread:$0]  %s1, 128, %s112, [#allocation6]
        $region20: #{tpu_custom_call.1} parent=11 // pred_fallthru
          _
      $region12: #{tpu_custom_call.1} parent=5 // pred_fallthru
        _
      %p115 = scmp.lt.s32.totalorder %s10, 2
      // Predicated region
      $region21: #{tpu_custom_call.1} parent=5 // pred_check
        %p116 = pneg %p115
      $region22: #{tpu_custom_call.1} parent=5 // pred_check_branch
        %118 = sbr.rel (%p116) target = $region24
      $region23: #{tpu_custom_call.1} parent=5 // pred_region
        _
      $region24: #{tpu_custom_call.1} parent=5 // pred_fallthru
        _
      %p119 = scmp.le.s32.totalorder 1, %s10
      %p120 = scmp.lt.s32.totalorder %s10, 3
      %p121 = pnand %p119, %p120
      %p122 = pneg %p121
      // Predicated region
      $region25: #{tpu_custom_call.1} parent=5 // pred_check
        _
      $region26: #{tpu_custom_call.1} parent=5 // pred_check_branch
        %124 = sbr.rel (%p121) target = $region28
      $region27: #{tpu_custom_call.1} parent=5 // pred_region
        %s125 = ssub.s32 %s10, 1
        // Predicated region
        $region29: #{tpu_custom_call.1} parent=27 // pred_check
          %p126 = pneg %p31
        $region30: #{tpu_custom_call.1} parent=27 // pred_check_branch
          %128 = sbr.rel (%p126) target = $region32
        $region31: #{tpu_custom_call.1} parent=27 // pred_region
          %129 = dma.done [#allocation4], 128
        $region32: #{tpu_custom_call.1} parent=27 // pred_fallthru
          _
        // Predicated region
        $region33: #{tpu_custom_call.1} parent=27 // pred_check
          %p130 = pneg %p52
        $region34: #{tpu_custom_call.1} parent=27 // pred_check_branch
          %132 = sbr.rel (%p130) target = $region36
        $region35: #{tpu_custom_call.1} parent=27 // pred_region
          %133 = dma.done [#allocation6], 128
        $region36: #{tpu_custom_call.1} parent=27 // pred_fallthru
          _
        %p134 = pneg %p31
        %p135 = pneg %p28
        %p136 = pneg %p52
        %p137 = pneg %p49
        %p138 = pneg %p78
        %p139 = pneg %p75
        %p140 = scmp.lt.s32.totalorder %s15, 1
        %s141 = scalar_select %p140, %s15, 1
        %s142 = smul.addr %s141, 8
        %s143 = scalar_lea.vmem %s2, %s142
        %p144 = scmp.lt.s32.totalorder %s15, 1
        %s145 = scalar_select %p144, %s15, 1
        %s146 = smul.addr %s145, 8
        %s147 = scalar_lea.vmem %s2, %s146
        %v148 = vld [vmem:[#allocation3] sm:$0xff]
        %v149 = vld [vmem:[#allocation5] sm:$0xff]
        %v150 = vmul.f32 %v148, %v148
        %vm151 = vcmask 261120
        %v152 = vsel %vm151, %v150, 0.0
        %153 = vadd.xlane.f32.xlu0 %v152
        %v154 = vpop.xlane.xlu0 %153
        %v155 = vmax.f32 %v154, 1e-16
        %v156 = vmul.f32 %v149, %v149
        %v157 = vsel %vm151, %v156, 0.0
        %158 = vadd.xlane.f32.xlu0 %v157
        %v159 = vpop.xlane.xlu0 %158
        %v160 = vmax.f32 %v159, 1e-16
        %v161 = vrsqrt.pop %v155
        %v162 = vmul.f32 %v161, 1.4142135
        %v163 = vmul.f32 %v148, %v162
        %v164 = vrsqrt.pop %v160
        %v165 = vmul.f32 %v164, 1.4142135
        %v166 = vmul.f32 %v149, %v165
        %167 = vst.msk [vmem:[#allocation2] sm:$0xff] %vm151, %v163
        %168 = vst.msk [vmem:[#allocation2 + $0x8] sm:$0xff] %vm151, %v166
        %s169 = smul.u32 %s15, 8
        %s170 = scalar_lea.vmem [#allocation2], %s169
        %v171 = vld [vmem:[%s170] sm:$0xff]
        %v172 = vld [vmem:[#allocation2] sm:$0xff]
        %v173 = vld [vmem:[#allocation2 + $0x8] sm:$0xff]
        %v175 = vsel %vm151, %v171, 0
        %v178 = vsel %vm151, %v172, 0
        %v181 = vsel %vm151, %v173, 0
        %183 = vmatprep.subr.mxu0 0.0
        %184 = vmatpush1.xpose.msra.mxu0 0.0
        %185 = vmatprep.subr.mxu0 0.0
        %186 = vmatpush1.xpose.msra.mxu0 0.0
        %187 = vmatprep.subr.mxu0 0.0
        %188 = vmatpush1.xpose.msra.mxu0 0.0
        %189 = vmatprep.subr.mxu0 0.0
        %190 = vmatpush1.xpose.msra.mxu0 0.0
        %191 = vmatprep.subr.mxu0 0.0
        %192 = vmatpush1.xpose.msra.mxu0 0.0
        %193 = vmatprep.subr.mxu0 0.0
        %194 = vmatpush1.xpose.msra.mxu0 0.0
        %195 = vmatprep.subr.mxu0 0.0
        %196 = vmatpush1.xpose.msra.mxu0 0.0
        %197 = vmatprep.subr.mxu0 0.0
        %198 = vmatpush1.xpose.msra.mxu0 0.0
        %199 = vmatprep.subr.mxu0 0.0
        %200 = vmatpush1.xpose.msra.mxu0 0.0
        %201 = vmatprep.subr.mxu0 0.0
        %202 = vmatpush1.xpose.msra.mxu0 0.0
        %203 = vmatprep.subr.mxu0 0.0
        %204 = vmatpush1.xpose.msra.mxu0 0.0
        %205 = vmatprep.subr.mxu0 0.0
        %206 = vmatpush1.xpose.msra.mxu0 0.0
        %207 = vmatprep.subr.mxu0 0.0
        %208 = vmatpush1.xpose.msra.mxu0 0.0
        %209 = vmatprep.subr.mxu0 0.0
        %210 = vmatpush1.xpose.msra.mxu0 0.0
        %211 = vmatprep.subr.mxu0 0.0
        %212 = vmatpush1.xpose.msra.mxu0 %v181
        %213 = vmatprep.subr.mxu0 0.0
        %214 = vmatpush1.xpose.msra.mxu0 %v178
        %215 = vmatprep.subr.mxu0 0.0
        %216 = vmatpush2.xpose.msra.mxu0 0.0
        %217 = vmatprep.subr.mxu0 0.0
        %218 = vmatpush2.xpose.msra.mxu0 0.0
        %219 = vmatprep.subr.mxu0 0.0
        %220 = vmatpush2.xpose.msra.mxu0 0.0
        %221 = vmatprep.subr.mxu0 0.0
        %222 = vmatpush2.xpose.msra.mxu0 0.0
        %223 = vmatprep.subr.mxu0 0.0
        %224 = vmatpush2.xpose.msra.mxu0 0.0
        %225 = vmatprep.subr.mxu0 0.0
        %226 = vmatpush2.xpose.msra.mxu0 0.0
        %227 = vmatprep.subr.mxu0 0.0
        %228 = vmatpush2.xpose.msra.mxu0 0.0
        %229 = vmatprep.subr.mxu0 0.0
        %230 = vmatpush2.xpose.msra.mxu0 0.0
        %231 = vmatprep.subr.mxu0 0.0
        %232 = vmatpush2.xpose.msra.mxu0 0.0
        %233 = vmatprep.subr.mxu0 0.0
        %234 = vmatpush2.xpose.msra.mxu0 0.0
        %235 = vmatprep.subr.mxu0 0.0
        %236 = vmatpush2.xpose.msra.mxu0 0.0
        %237 = vmatprep.subr.mxu0 0.0
        %238 = vmatpush2.xpose.msra.mxu0 0.0
        %239 = vmatprep.subr.mxu0 0.0
        %240 = vmatpush2.xpose.msra.mxu0 0.0
        %241 = vmatprep.subr.mxu0 0.0
        %242 = vmatpush2.xpose.msra.mxu0 0.0
        %243 = vmatprep.subr.mxu0 0.0
        %244 = vmatpush2.xpose.msra.mxu0 0.0
        %245 = vmatprep.subr.mxu0 0.0
        %246 = vmatpush2.xpose.msra.mxu0 0.0
        %247 = vmatprep.mubr.f32.mxu0 0.0
        %248 = vmatmul.mubr.f32.gmra.mxu0 %v175
        %v249 = vpop.f32.mrf.mxu0
        %v250 = vadd.f32 0.0, %v249
        %v251 = vpop.f32.mrf.mxu0
        %252 = vdwg.mxu0
        %v253 = vlaneseq
        %v254 = vshrl.u32 %v253, 7
        %v255 = vstv %s169
        %v256 = vadd.s32 %v254, %v255
        %v257 = vlaneseq
        %v258 = vand.u32 %v257, 127
        %s259 = sadd.s32 %s169, 8
        %p260 = scmp.lt.s32.totalorder %s259, 0
        %s261 = ssub.s32 0, %s259
        %s262 = scalar_select %p260, %s261, %s259
        %s263 = sand.u32 %s262, 15
        %s264 = ssub.s32 0, %s263
        %s265 = scalar_select %p260, %s264, %s263
        %p266 = scmp.ne.s32.totalorder %s265, 0
        %p267 = scmp.lt.s32.totalorder %s265, 0
        %p268 = pnand %p267, %p266
        %p269 = pneg %p268
        %s270 = sadd.s32 %s265, 16
        %s271 = scalar_select %p269, %s270, %s265
        %s272 = scalar_lea.vmem [#allocation2], %s271
        %v273 = vld [vmem:[%s272] sm:$0xff]
        %v274 = vmul.f32 %v171, %v273
        %v275 = vsel %vm151, %v274, 0.0
        %276 = vadd.xlane.f32.xlu0 %v275
        %v277 = vpop.xlane.xlu0 %276
        %vm278 = vcmp.eq.s32.totalorder %v256, %v258
        %v279 = vsel %vm278, -inf, %v250
        %vm280 = vcmask 130048
        %v281 = vsel %vm280, %v279, -inf
        %282 = vmax.xlane.f32.xlu0 %v281
        %v283 = vpop.xlane.xlu0 %282
        %v284 = vsub.f32 %v279, %v283
        %v285 = vmul.f32 %v284, 1.442695
        %v286 = vpow.pop %v285
        %v287 = vsel %vm280, %v286, 0.0
        %288 = vadd.xlane.f32.xlu0 %v287
        %v289 = vpop.xlane.xlu0 %288
        %v290 = vlog2.pop %v289
        %v291 = vmul.f32 %v290, 0.6931472
        %v292 = vadd.f32 %v283, %v291
        %v293 = vsub.f32 %v292, %v277
        %vm294 = vcmask 7168
        %295 = vst.msk [vmem:[%s147] sm:$0xff] %vm294, %v293
        %p296 = scmp.lt.s32.totalorder %s15, 1
        %s297 = scalar_select %p296, %s15, 1
        %s298 = smul.addr %s297, 8
        %s299 = scalar_lea.vmem %s2, %s298
        // Predicated region
        $region37: #{tpu_custom_call.1} parent=27 // pred_check
          %p300 = pneg %p75
        $region38: #{tpu_custom_call.1} parent=27 // pred_check_branch
          %302 = sbr.rel (%p300) target = $region40
        $region39: #{tpu_custom_call.1} parent=27 // pred_region
          _
        $region40: #{tpu_custom_call.1} parent=27 // pred_fallthru
          _
      $region28: #{tpu_custom_call.1} parent=5 // pred_fallthru
        _
      %p303 = scmp.le.s32.totalorder 2, %s10
      // Predicated region
      $region41: #{tpu_custom_call.1} parent=5 // pred_check
        %p304 = pneg %p303
      $region42: #{tpu_custom_call.1} parent=5 // pred_check_branch
        %306 = sbr.rel (%p304) target = $region44
      $region43: #{tpu_custom_call.1} parent=5 // pred_region
        %s307 = ssub.s32 %s10, 2
        // Predicated region
        $region45: #{tpu_custom_call.1} parent=43 // pred_check
          %p308 = pneg %p81
        $region46: #{tpu_custom_call.1} parent=43 // pred_check_branch
          %310 = sbr.rel (%p308) target = $region48
        $region47: #{tpu_custom_call.1} parent=43 // pred_region
          %p311 = scmp.lt.s32.totalorder %s16, 1
          %s312 = scalar_select %p311, %s16, 1
          %s313 = smul.addr %s312, 8
          %s314 = scalar_lea.vmem %s2, %s313
        $region48: #{tpu_custom_call.1} parent=43 // pred_fallthru
          _
      $region44: #{tpu_custom_call.1} parent=5 // pred_fallthru
        _
    $region6: #{tpu_custom_call.1} parent=1 // loop_footer
      %s14 = sadd.s32 1, %s10
    $region7: #{tpu_custom_call.1} parent=1 // loop_footer_branch
      %9 = sbr.rel target = $region3
    $region8: #{tpu_custom_call.1} parent=1 // loop_exit
      _
    %315 = vsyncpa [#allocation4], 1
    %s316 = scalar_lea.sflag [#allocation4], 1
    %317 = vsyncpa %s316, 1
    %318 = vsyncpa [#allocation6], 1

</llo_original>
